<compile_context>
chip_gen: v7x
topology: tpu7x:2x2x1
jax: 0.10.0
libtpu: 0.0.40
codegen_flags: <defaults>
</compile_context>

<pallas_src>
import functools

import jax
import jax.numpy as jnp
from jax import lax
from jax.experimental import pallas as pl
from jax.experimental.pallas import tpu as pltpu

_LANE = 128


def _sublane_multiple(dtype):
    """Packed-sublane tile: 8 for 32-bit, 16 for 16-bit, 32 for 8-bit dtypes."""
    nbytes = jnp.dtype(dtype).itemsize
    return 8 * max(1, 4 // nbytes)


def _chip_info():
    """(tensorcores_per_chip, scoped_vmem_default_bytes) with safe fallbacks."""
    kind = ""
    try:
        kind = jax.devices()[0].device_kind.lower()
    except Exception:
        pass
    if "v7" in kind:               # 2 TensorCores/chip, 32 MiB default scoped VMEM
        return 2, 32 * 1024 * 1024
    if "v6" in kind:               # 1 TensorCore, 32 MiB default scoped VMEM
        return 1, 32 * 1024 * 1024
    # v5e / older / unknown: 1 TensorCore, 16 MiB default scoped VMEM.
    return 1, 16 * 1024 * 1024


def _dice_sums_kernel(x_ref, t_ref, inter_ref, a_ref, b_ref,
                      acc_xt, acc_xx, acc_tt,
                      *, steps, last_block, valid_rows_last,
                      ragged_last, has_waste, acc_rows):
    c = pl.program_id(0)          # parallel slice (one per TensorCore on v7x)
    i = pl.program_id(1)          # reduction step within the slice

    @pl.when(i == 0)
    def _init():
        acc_xt[...] = jnp.zeros_like(acc_xt)
        acc_xx[...] = jnp.zeros_like(acc_xx)
        acc_tt[...] = jnp.zeros_like(acc_tt)

    blk = c * steps + i           # global (unclamped) block index

    def _partial(v):
        # Reduce a (tile_rows, 128) product only down to the accumulator
        # shape: pure VPU vreg adds, no per-step XLU sublane reduce.
        if acc_rows == 8:
            return v.reshape(-1, 8, _LANE).sum(axis=0)
        return jnp.sum(v, axis=0, keepdims=True)

    def _accumulate(x, t):
        acc_xt[...] += _partial(x * t)
        acc_xx[...] += _partial(x * x)
        acc_tt[...] += _partial(t * t)

    def _plain():
        # Streamed from HBM in the native dtype; widened in-register.
        x = x_ref[...].astype(jnp.float32)
        t = t_ref[...].astype(jnp.float32)
        _accumulate(x, t)

    if ragged_last or has_waste:
        # Full blocks: no masking work at all.
        full_cond = (blk < last_block) if ragged_last else (blk <= last_block)
        pl.when(full_cond)(_plain)

        if ragged_last:
            # Exactly one ragged block pays the iota/where mask cost.
            @pl.when(blk == last_block)
            def _ragged():
                x = x_ref[...].astype(jnp.float32)
                t = t_ref[...].astype(jnp.float32)
                row_ids = lax.broadcasted_iota(jnp.int32, x.shape, 0)
                keep = row_ids < valid_rows_last
                x = jnp.where(keep, x, 0.0)
                t = jnp.where(keep, t, 0.0)
                _accumulate(x, t)
        # blk > last_block: clamped trailing waste step of the last slice;
        # all compute is skipped (only the already-pipelined DMA happened).
    else:
        _plain()

    @pl.when(i == pl.num_programs(1) - 1)
    def _finalize():
        inter_ref[0, 0] = jnp.sum(acc_xt[...])
        a_ref[0, 0] = jnp.sum(acc_xx[...])
        b_ref[0, 0] = jnp.sum(acc_tt[...])


def _dice_sums(x2, t2, max_tile_rows, num_parallel):
    """Per-slice partial sums (sum x*t, sum x*x, sum t*t) of a (rows,128) slab."""
    rows = x2.shape[0]
    sub = max(_sublane_multiple(x2.dtype), _sublane_multiple(t2.dtype))
    cores, scoped_vmem = _chip_info()

    # VMEM-aware tile size: target ~60% of the default scoped-VMEM budget for
    # the double-buffered input windows (2 inputs x 2 pipeline buffers), which
    # gives ~8K-row f32 tiles on v6e/v7x and ~5K rows on v5e -- big enough to
    # amortize the ~0.35 us per-step overhead while leaving scratch headroom.
    bytes_per_row = 2 * _LANE * (jnp.dtype(x2.dtype).itemsize +
                                 jnp.dtype(t2.dtype).itemsize)
    budget_rows = max(sub, int(0.6 * scoped_vmem) // bytes_per_row)
    if max_tile_rows is not None:
        budget_rows = min(budget_rows, max_tile_rows)

    if rows <= budget_rows:
        tile_rows = rows              # full extent: always a legal block shape
    else:
        tile_rows = max(sub, (budget_rows // sub) * sub)

    total_blocks = pl.cdiv(rows, tile_rows)
    if num_parallel is None:
        num_parallel = cores          # 2 only on v7x; 1 on single-core chips
    k = max(1, min(num_parallel, total_blocks))
    steps = pl.cdiv(total_blocks, k)
    last_block = total_blocks - 1
    ragged_last = (rows % tile_rows) != 0
    has_waste = (k * steps) != total_blocks
    acc_rows = 8 if tile_rows % 8 == 0 else 1

    def in_map(c, i):
        # Clamp the (at most k-1) trailing waste steps of the last slice onto
        # a valid block; the kernel skips their compute entirely.
        return (jnp.minimum(c * steps + i, last_block), 0)

    scalar_shape = jax.ShapeDtypeStruct((k, 1), jnp.float32)
    scalar_spec = pl.BlockSpec((1, 1), lambda c, i: (c, 0),
                               memory_space=pltpu.SMEM)

    kernel = functools.partial(
        _dice_sums_kernel,
        steps=steps, last_block=last_block,
        valid_rows_last=rows - last_block * tile_rows,
        ragged_last=ragged_last, has_waste=has_waste, acc_rows=acc_rows)

    # Only request true core-sharding when the chip actually has >1 TensorCore
    # (v7x); plain "parallel"/"arbitrary" have near-zero codegen impact.
    if k > 1 and cores > 1 and hasattr(pltpu, "CORE_PARALLEL"):
        dim_sem = (pltpu.CORE_PARALLEL, pltpu.ARBITRARY)
    elif k > 1:
        dim_sem = ("parallel", "arbitrary")
    else:
        dim_sem = ("arbitrary", "arbitrary")

    return pl.pallas_call(
        kernel,
        out_shape=(scalar_shape, scalar_shape, scalar_shape),
        grid_spec=pltpu.PrefetchScalarGridSpec(
            num_scalar_prefetch=0,
            grid=(k, steps),
            in_specs=[
                # Optional sweep: pipeline_mode=pl.Buffered(3) if a trace
                # shows exposed DMA at step boundaries (measure first).
                pl.BlockSpec((tile_rows, _LANE), in_map),
                pl.BlockSpec((tile_rows, _LANE), in_map),
            ],
            out_specs=(scalar_spec, scalar_spec, scalar_spec),
            scratch_shapes=[pltpu.VMEM((acc_rows, _LANE), jnp.float32)] * 3,
        ),
        compiler_params=pltpu.CompilerParams(dimension_semantics=dim_sem),
    )(x2, t2)


def dice_loss(inp, target, *, max_tile_rows=None, num_parallel=None):
    """Pallas implementation of DiceLoss.forward (smooth = 1.0).

    Tip: if `target` is a {0,1} mask, pass it as bf16/int8 from the caller --
    the kernel widens in-register, and the narrower dtype halves its HBM
    traffic on this bandwidth-bound reduction.
    """
    smooth = 1.0

    xf = inp.reshape(-1)
    tf = target.reshape(-1)
    n = xf.shape[0]
    if n == 0:
        return jnp.float32(1.0 - smooth / smooth)

    n_main = (n // _LANE) * _LANE

    # <128-element tail: three tiny dot products in JAX -- avoids padding
    # (and re-materializing) the whole tensor in HBM for misaligned inputs.
    if n_main < n:
        xt = xf[n_main:].astype(jnp.float32)
        tt = tf[n_main:].astype(jnp.float32)
        tail_inter = jnp.sum(xt * tt)
        tail_a = jnp.sum(xt * xt)
        tail_b = jnp.sum(tt * tt)
    else:
        tail_inter = tail_a = tail_b = jnp.float32(0.0)

    if n_main == 0:
        intersection, a_sum, b_sum = tail_inter, tail_a, tail_b
    else:
        x2 = xf[:n_main].reshape(-1, _LANE)   # zero-copy in the aligned case
        t2 = tf[:n_main].reshape(-1, _LANE)
        inter_p, a_p, b_p = _dice_sums(x2, t2, max_tile_rows, num_parallel)
        intersection = jnp.sum(inter_p) + tail_inter
        a_sum = jnp.sum(a_p) + tail_a
        b_sum = jnp.sum(b_p) + tail_b

    return 1.0 - (2.0 * intersection + smooth) / (a_sum + b_sum + smooth)


def _dice_loss_ref(inp, target):
    smooth = 1.0
    iflat = inp.reshape(-1).astype(jnp.float32)
    tflat = target.reshape(-1).astype(jnp.float32)
    intersection = jnp.sum(iflat * tflat)
    a_sum = jnp.sum(iflat * iflat)
    b_sum = jnp.sum(tflat * tflat)
    return 1.0 - (2.0 * intersection + smooth) / (a_sum + b_sum + smooth)


if __name__ == "__main__":
    key = jax.random.PRNGKey(0)
    k1, k2, k3, k4, k5, k6 = jax.random.split(key, 6)

    # 1) Primary case: segmentation-style (N, C, H, W) f32 probabilities vs
    #    {0,1} mask; single block, no masking path.
    x = jax.nn.sigmoid(jax.random.normal(k1, (2, 4, 16, 16), dtype=jnp.float32))
    t = (jax.random.uniform(k2, (2, 4, 16, 16)) > 0.5).astype(jnp.float32)
    loss = jax.block_until_ready(dice_loss(x, t))
    ref = _dice_loss_ref(x, t)
    assert jnp.allclose(loss, ref, rtol=1e-5, atol=1e-6), (loss, ref)

    # 2) Native-bf16 streaming, multi-block grid, forced two parallel slices:
    #    exercises the gated ragged-last-block mask AND a clamped waste step.
    xb = jax.nn.sigmoid(jax.random.normal(k3, (2, 3, 40, 48), dtype=jnp.bfloat16))
    tb = (jax.random.uniform(k4, (2, 3, 40, 48)) > 0.5).astype(jnp.bfloat16)
    loss_b = jax.block_until_ready(
        dice_loss(xb, tb, max_tile_rows=32, num_parallel=2))
    ref_b = _dice_loss_ref(xb, tb)
    assert jnp.allclose(loss_b, ref_b, rtol=1e-4, atol=1e-5), (loss_b, ref_b)

    # 3) Element count not a multiple of 128: lane-aligned slab in the kernel
    #    plus the tiny JAX tail epilogue (no whole-array pad).
    xr = jax.nn.sigmoid(jax.random.normal(k5, (1000,), dtype=jnp.float32))
    tr = (jax.random.uniform(k6, (1000,)) > 0.5).astype(jnp.float32)
    loss_r = jax.block_until_ready(dice_loss(xr, tr))
    ref_r = _dice_loss_ref(xr, tr)
    assert jnp.allclose(loss_r, ref_r, rtol=1e-5, atol=1e-6), (loss_r, ref_r)

    print("KERNEL_OK")
</pallas_src>

<mosaic_0001>
module attributes {stable_mosaic.version = 11 : i64} {
  func.func @_dice_sums_kernel(%arg0: i32, %arg1: i32, %arg2: memref<16x128xf32, #tpu.memory_space<vmem>>, %arg3: memref<16x128xf32, #tpu.memory_space<vmem>>, %arg4: memref<1x1xf32, #tpu.memory_space<smem>>, %arg5: memref<1x1xf32, #tpu.memory_space<smem>>, %arg6: memref<1x1xf32, #tpu.memory_space<smem>>, %arg7: memref<8x128xf32, #tpu.memory_space<vmem>>, %arg8: memref<8x128xf32, #tpu.memory_space<vmem>>, %arg9: memref<8x128xf32, #tpu.memory_space<vmem>>) attributes {dimension_semantics = [#tpu.dimension_semantics<arbitrary>, #tpu.dimension_semantics<arbitrary>], iteration_bounds = array<i64: 1, 1>, scalar_prefetch = 0 : i64, scratch_operands = 3 : i64, tpu.core_type = #tpu.core_type<tc>, window_params = [{transform_indices = @transform_0, window_bounds = array<i64: 16, 128>}, {transform_indices = @transform_1, window_bounds = array<i64: 16, 128>}, {transform_indices = @transform_2, window_bounds = array<i64: 1, 1>}, {transform_indices = @transform_3, window_bounds = array<i64: 1, 1>}, {transform_indices = @transform_4, window_bounds = array<i64: 1, 1>}]} {
    %c0_i32 = arith.constant 0 : i32
    %0 = arith.cmpi eq, %arg1, %c0_i32 : i32
    %1 = arith.extui %0 : i1 to i32
    %c0_i32_0 = arith.constant 0 : i32
    %2 = arith.cmpi ne, %1, %c0_i32_0 : i32
    scf.if %2 {
      %cst_20 = arith.constant 0.000000e+00 : f32
      %26 = vector.broadcast %cst_20 : f32 to vector<8x128xf32>
      %c0_21 = arith.constant 0 : index
      %c0_22 = arith.constant 0 : index
      %27 = vector.load %arg7[%c0_21, %c0_22] : memref<8x128xf32, #tpu.memory_space<vmem>>, vector<8x128xf32>
      tpu.vector_store %arg7[%c0_21, %c0_22], %26 {strides = array<i32>} : memref<8x128xf32, #tpu.memory_space<vmem>>, vector<8x128xf32>,
      %cst_23 = arith.constant 0.000000e+00 : f32
      %28 = vector.broadcast %cst_23 : f32 to vector<8x128xf32>
      %c0_24 = arith.constant 0 : index
      %c0_25 = arith.constant 0 : index
      %29 = vector.load %arg8[%c0_24, %c0_25] : memref<8x128xf32, #tpu.memory_space<vmem>>, vector<8x128xf32>
      tpu.vector_store %arg8[%c0_24, %c0_25], %28 {strides = array<i32>} : memref<8x128xf32, #tpu.memory_space<vmem>>, vector<8x128xf32>,
      %cst_26 = arith.constant 0.000000e+00 : f32
      %30 = vector.broadcast %cst_26 : f32 to vector<8x128xf32>
      %c0_27 = arith.constant 0 : index
      %c0_28 = arith.constant 0 : index
      %31 = vector.load %arg9[%c0_27, %c0_28] : memref<8x128xf32, #tpu.memory_space<vmem>>, vector<8x128xf32>
      tpu.vector_store %arg9[%c0_27, %c0_28], %30 {strides = array<i32>} : memref<8x128xf32, #tpu.memory_space<vmem>>, vector<8x128xf32>,
    } else {
    }
    %c0 = arith.constant 0 : index
    %c0_1 = arith.constant 0 : index
    %3 = vector.load %arg2[%c0, %c0_1] : memref<16x128xf32, #tpu.memory_space<vmem>>, vector<16x128xf32>
    %c0_2 = arith.constant 0 : index
    %c0_3 = arith.constant 0 : index
    %4 = vector.load %arg3[%c0_2, %c0_3] : memref<16x128xf32, #tpu.memory_space<vmem>>, vector<16x128xf32>
    %c0_4 = arith.constant 0 : index
    %c0_5 = arith.constant 0 : index
    %5 = vector.load %arg7[%c0_4, %c0_5] : memref<8x128xf32, #tpu.memory_space<vmem>>, vector<8x128xf32>
    %6 = arith.mulf %3, %4 : vector<16x128xf32>
    %7 = vector.shape_cast %6 : vector<16x128xf32> to vector<2x8x128xf32>
    %cst = arith.constant dense<0.000000e+00> : vector<8x128xf32>
    %8 = vector.multi_reduction <add>, %7, %cst [0] : vector<2x8x128xf32> to vector<8x128xf32>
    %9 = arith.addf %5, %8 : vector<8x128xf32>
    %c0_6 = arith.constant 0 : index
    %c0_7 = arith.constant 0 : index
    %10 = vector.load %arg7[%c0_6, %c0_7] : memref<8x128xf32, #tpu.memory_space<vmem>>, vector<8x128xf32>
    tpu.vector_store %arg7[%c0_6, %c0_7], %9 {strides = array<i32>} : memref<8x128xf32, #tpu.memory_space<vmem>>, vector<8x128xf32>,
    %c0_8 = arith.constant 0 : index
    %c0_9 = arith.constant 0 : index
    %11 = vector.load %arg8[%c0_8, %c0_9] : memref<8x128xf32, #tpu.memory_space<vmem>>, vector<8x128xf32>
    %12 = arith.mulf %3, %3 : vector<16x128xf32>
    %13 = vector.shape_cast %12 : vector<16x128xf32> to vector<2x8x128xf32>
    %cst_10 = arith.constant dense<0.000000e+00> : vector<8x128xf32>
    %14 = vector.multi_reduction <add>, %13, %cst_10 [0] : vector<2x8x128xf32> to vector<8x128xf32>
    %15 = arith.addf %11, %14 : vector<8x128xf32>
    %c0_11 = arith.constant 0 : index
    %c0_12 = arith.constant 0 : index
    %16 = vector.load %arg8[%c0_11, %c0_12] : memref<8x128xf32, #tpu.memory_space<vmem>>, vector<8x128xf32>
    tpu.vector_store %arg8[%c0_11, %c0_12], %15 {strides = array<i32>} : memref<8x128xf32, #tpu.memory_space<vmem>>, vector<8x128xf32>,
    %c0_13 = arith.constant 0 : index
    %c0_14 = arith.constant 0 : index
    %17 = vector.load %arg9[%c0_13, %c0_14] : memref<8x128xf32, #tpu.memory_space<vmem>>, vector<8x128xf32>
    %18 = arith.mulf %4, %4 : vector<16x128xf32>
    %19 = vector.shape_cast %18 : vector<16x128xf32> to vector<2x8x128xf32>
    %cst_15 = arith.constant dense<0.000000e+00> : vector<8x128xf32>
    %20 = vector.multi_reduction <add>, %19, %cst_15 [0] : vector<2x8x128xf32> to vector<8x128xf32>
    %21 = arith.addf %17, %20 : vector<8x128xf32>
    %c0_16 = arith.constant 0 : index
    %c0_17 = arith.constant 0 : index
    %22 = vector.load %arg9[%c0_16, %c0_17] : memref<8x128xf32, #tpu.memory_space<vmem>>, vector<8x128xf32>
    tpu.vector_store %arg9[%c0_16, %c0_17], %21 {strides = array<i32>} : memref<8x128xf32, #tpu.memory_space<vmem>>, vector<8x128xf32>,
    %c0_i32_18 = arith.constant 0 : i32
    %23 = arith.cmpi eq, %arg1, %c0_i32_18 : i32
    %24 = arith.extui %23 : i1 to i32
    %c0_i32_19 = arith.constant 0 : i32
    %25 = arith.cmpi ne, %24, %c0_i32_19 : i32
    scf.if %25 {
      %c0_20 = arith.constant 0 : index
      %c0_21 = arith.constant 0 : index
      %26 = vector.load %arg7[%c0_20, %c0_21] : memref<8x128xf32, #tpu.memory_space<vmem>>, vector<8x128xf32>
      %27 = vector.shape_cast %26 : vector<8x128xf32> to vector<1x8x128xf32>
      %cst_22 = arith.constant dense<0.000000e+00> : vector<1xf32>
      %28 = vector.multi_reduction <add>, %27, %cst_22 [1, 2] : vector<1x8x128xf32> to vector<1xf32>
      %29 = vector.shape_cast %28 : vector<1xf32> to vector<1x1x1xf32>
      %30 = vector.extract %29[0, 0, 0] : f32 from vector<1x1x1xf32>
      %c0_23 = arith.constant 0 : index
      %c0_24 = arith.constant 0 : index
      %31 = memref.load %arg4[%c0_23, %c0_24] : memref<1x1xf32, #tpu.memory_space<smem>>
      memref.store %30, %arg4[%c0_23, %c0_24] : memref<1x1xf32, #tpu.memory_space<smem>>
      %c0_25 = arith.constant 0 : index
      %c0_26 = arith.constant 0 : index
      %32 = vector.load %arg8[%c0_25, %c0_26] : memref<8x128xf32, #tpu.memory_space<vmem>>, vector<8x128xf32>
      %33 = vector.shape_cast %32 : vector<8x128xf32> to vector<1x8x128xf32>
      %cst_27 = arith.constant dense<0.000000e+00> : vector<1xf32>
      %34 = vector.multi_reduction <add>, %33, %cst_27 [1, 2] : vector<1x8x128xf32> to vector<1xf32>
      %35 = vector.shape_cast %34 : vector<1xf32> to vector<1x1x1xf32>
      %36 = vector.extract %35[0, 0, 0] : f32 from vector<1x1x1xf32>
      %c0_28 = arith.constant 0 : index
      %c0_29 = arith.constant 0 : index
      %37 = memref.load %arg5[%c0_28, %c0_29] : memref<1x1xf32, #tpu.memory_space<smem>>
      memref.store %36, %arg5[%c0_28, %c0_29] : memref<1x1xf32, #tpu.memory_space<smem>>
      %c0_30 = arith.constant 0 : index
      %c0_31 = arith.constant 0 : index
      %38 = vector.load %arg9[%c0_30, %c0_31] : memref<8x128xf32, #tpu.memory_space<vmem>>, vector<8x128xf32>
      %39 = vector.shape_cast %38 : vector<8x128xf32> to vector<1x8x128xf32>
      %cst_32 = arith.constant dense<0.000000e+00> : vector<1xf32>
      %40 = vector.multi_reduction <add>, %39, %cst_32 [1, 2] : vector<1x8x128xf32> to vector<1xf32>
      %41 = vector.shape_cast %40 : vector<1xf32> to vector<1x1x1xf32>
      %42 = vector.extract %41[0, 0, 0] : f32 from vector<1x1x1xf32>
      %c0_33 = arith.constant 0 : index
      %c0_34 = arith.constant 0 : index
      %43 = memref.load %arg6[%c0_33, %c0_34] : memref<1x1xf32, #tpu.memory_space<smem>>
      memref.store %42, %arg6[%c0_33, %c0_34] : memref<1x1xf32, #tpu.memory_space<smem>>
    } else {
    }
    return
  }
  func.func @transform_0(%arg0: i32, %arg1: i32) -> (i32, i32) {
    %c1_i32 = arith.constant 1 : i32
    %0 = arith.muli %arg0, %c1_i32 : i32
    %1 = arith.addi %0, %arg1 : i32
    %c0_i32 = arith.constant 0 : i32
    %2 = arith.minsi %1, %c0_i32 : i32
    %c0_i32_0 = arith.constant 0 : i32
    %c0_i32_1 = arith.constant 0 : i32
    return %2, %c0_i32_0 : i32, i32
  }
  func.func @transform_1(%arg0: i32, %arg1: i32) -> (i32, i32) {
    %c1_i32 = arith.constant 1 : i32
    %0 = arith.muli %arg0, %c1_i32 : i32
    %1 = arith.addi %0, %arg1 : i32
    %c0_i32 = arith.constant 0 : i32
    %2 = arith.minsi %1, %c0_i32 : i32
    %c0_i32_0 = arith.constant 0 : i32
    %c0_i32_1 = arith.constant 0 : i32
    return %2, %c0_i32_0 : i32, i32
  }
  func.func @transform_2(%arg0: i32, %arg1: i32) -> (i32, i32) {
    %c0_i32 = arith.constant 0 : i32
    %c0_i32_0 = arith.constant 0 : i32
    return %arg0, %c0_i32 : i32, i32
  }
  func.func @transform_3(%arg0: i32, %arg1: i32) -> (i32, i32) {
    %c0_i32 = arith.constant 0 : i32
    %c0_i32_0 = arith.constant 0 : i32
    return %arg0, %c0_i32 : i32, i32
  }
  func.func @transform_4(%arg0: i32, %arg1: i32) -> (i32, i32) {
    %c0_i32 = arith.constant 0 : i32
    %c0_i32_0 = arith.constant 0 : i32
    return %arg0, %c0_i32 : i32, i32
  }
}

</mosaic_0001>

<llo_original>
// kernel: tpu_custom_call.1
$region0: #{tpu_custom_call.1}
  #allocation0 [shape = 'u32[]', space=smem, size = 0x4, offset = 0x4, fixed_abs, tag = 'smem constant byte address 0x4 - core index']
  #allocation1 [shape = 'u32[144,128]{1,0:T(1,128)}', space=vmem, size = 0x12000, scoped, tag = 'internal scratch']
  #allocation2 [shape = 'f32[8,128]{1,0:T(8,128)}', space=vmem, size = 0x1000, scoped, tag = 'scratch operand']
  #allocation3 [shape = 'f32[8,128]{1,0:T(8,128)}', space=vmem, size = 0x1000, scoped, tag = 'scratch operand']
  #allocation4 [shape = 'f32[8,128]{1,0:T(8,128)}', space=vmem, size = 0x1000, scoped, tag = 'scratch operand']
  %s0 = inlined_call_operand.hbm [shape: f32[16,128], index: 0, kind: input, shape index: {}]
  %s1 = inlined_call_operand.hbm [shape: f32[16,128], index: 1, kind: input, shape index: {}]
  %s2 = inlined_call_operand.hbm [shape: f32[1,1], index: 2, kind: output, shape index: {0}]
  %s3 = inlined_call_operand.hbm [shape: f32[1,1], index: 3, kind: output, shape index: {1}]
  %s4 = inlined_call_operand.hbm [shape: f32[1,1], index: 4, kind: output, shape index: {2}]
  %5 = xla_tuple %s2, %s3, %s4
  %s6 = sld [smem:[#allocation0]]
  $region50: #{tpu_custom_call.1} parent=0
    _
  %s8 = ssub.s32 1, %s6
  %s9 = scalar_select 0, %s8, %s6
  $region1: #{tpu_custom_call.1} parent=0
    #allocation5 [shape = 'u8[8192]{0}', space=vmem, size = 0x2000, scoped, tag = 'input window, operand 0, single buffered']
    #allocation6 [shape = 's32[1]{0}', space=sflag, size = 0x4, scoped, tag = 'scoped memory for tpu_custom_call.1']
    #allocation7 [shape = 's32[1]{0}', space=sflag, size = 0x4, scoped, tag = 'scoped memory for tpu_custom_call.1']
    #allocation8 [shape = 'u8[8192]{0}', space=vmem, size = 0x2000, scoped, tag = 'input window, operand 1, single buffered']
    #allocation9 [shape = 's32[1]{0}', space=sflag, size = 0x4, scoped, tag = 'scoped memory for tpu_custom_call.1']
    #allocation10 [shape = 'u8[512]{0}', space=smem, size = 0x200, scoped, tag = 'output window, operand 0, single buffered']
    #allocation11 [shape = 'u8[512]{0}', space=smem, size = 0x200, scoped, tag = 'output window, operand 1, single buffered']
    #allocation12 [shape = 's32[1]{0}', space=sflag, size = 0x4, scoped, tag = 'scoped memory for tpu_custom_call.1']
    #allocation13 [shape = 'u8[512]{0}', space=smem, size = 0x200, scoped, tag = 'output window, operand 2, single buffered']
    %10 = vsyncpa [#allocation6], 0
    %11 = vsyncpa [#allocation9], 0
    %12 = vsyncpa [#allocation7], 0
    %13 = vsyncpa [#allocation12], 0
    // Predicated region
    $region2: #{tpu_custom_call.1} parent=1 // pred_check
      _
    $region3: #{tpu_custom_call.1} parent=1 // pred_check_branch
      %15 = sbr.rel (0) target = $region5
    $region4: #{tpu_custom_call.1} parent=1 // pred_region
      %s16 = sadd.s32 0, 0
      %p17 = scmp.lt.s32.totalorder %s16, 0
      %s18 = scalar_select %p17, %s16, 0
      %s19 = smul.u32 2, %s18
      %s21 = ssub.s32 256, 256
      %22 = vsyncadd [#allocation6], %s21
      %s23 = smul.addr %s19, 128
      %s24 = scalar_lea.hbm %s0, %s23
      %s25 = sshll.u32 [#allocation5], 4
      %s26 = int_to_ptr.vmem [resolvable:$true] %s25
      %31 = dma.hbm_to_vmem [thread:$0]  %s24, 256, %s26, [#allocation6], 128, 128, 8
    $region5: #{tpu_custom_call.1} parent=1 // pred_fallthru
      _
    // Predicated region
    $region6: #{tpu_custom_call.1} parent=1 // pred_check
      _
    $region7: #{tpu_custom_call.1} parent=1 // pred_check_branch
      %33 = sbr.rel (0) target = $region9
    $region8: #{tpu_custom_call.1} parent=1 // pred_region
      %s34 = sadd.s32 0, 0
      %p35 = scmp.lt.s32.totalorder %s34, 0
      %s36 = scalar_select %p35, %s34, 0
      %s37 = smul.u32 2, %s36
      %s39 = ssub.s32 256, 256
      %40 = vsyncadd [#allocation9], %s39
      %s41 = smul.addr %s37, 128
      %s42 = scalar_lea.hbm %s1, %s41
      %s43 = sshll.u32 [#allocation8], 4
      %s44 = int_to_ptr.vmem [resolvable:$true] %s43
      %49 = dma.hbm_to_vmem [thread:$0]  %s42, 256, %s44, [#allocation9], 128, 128, 8
    $region9: #{tpu_custom_call.1} parent=1 // pred_fallthru
      _
    // Predicated region
    $region10: #{tpu_custom_call.1} parent=1 // pred_check
      _
    $region11: #{tpu_custom_call.1} parent=1 // pred_check_branch
      %51 = sbr.rel (0) target = $region13
    $region12: #{tpu_custom_call.1} parent=1 // pred_region
      %52 = dma.done [#allocation6], 256
    $region13: #{tpu_custom_call.1} parent=1 // pred_fallthru
      _
    // Predicated region
    $region14: #{tpu_custom_call.1} parent=1 // pred_check
      _
    $region15: #{tpu_custom_call.1} parent=1 // pred_check_branch
      %54 = sbr.rel (0) target = $region17
    $region16: #{tpu_custom_call.1} parent=1 // pred_region
      %55 = dma.done [#allocation9], 256
    $region17: #{tpu_custom_call.1} parent=1 // pred_fallthru
      _
    %s56 = sadd.s32 0, 0
    %p57 = scmp.lt.s32.totalorder %s56, 0
    %s58 = scalar_select %p57, %s56, 0
    %s59 = smul.u32 2, %s58
    %s60 = sadd.s32 0, 0
    %p61 = scmp.lt.s32.totalorder %s60, 0
    %s62 = scalar_select %p61, %s60, 0
    %s63 = smul.u32 2, %s62
    %p64 = scmp.eq.s32.totalorder 0, 0
    // Predicated region
    $region18: #{tpu_custom_call.1} parent=1 // pred_check
      %p65 = pneg %p64
    $region19: #{tpu_custom_call.1} parent=1 // pred_check_branch
      %67 = sbr.rel (%p65) target = $region21
    $region20: #{tpu_custom_call.1} parent=1 // pred_region
      %68 = vst [vmem:[#allocation2] sm:$0xff] 0.0
      %69 = vst [vmem:[#allocation3] sm:$0xff] 0.0
      %70 = vst [vmem:[#allocation4] sm:$0xff] 0.0
    $region21: #{tpu_custom_call.1} parent=1 // pred_fallthru
      _
    %v71 = vld [vmem:[#allocation5] sm:$0xff]
    %v72 = vld [vmem:[#allocation5 + $0x8] sm:$0xff]
    %v73 = vld [vmem:[#allocation8] sm:$0xff]
    %v74 = vld [vmem:[#allocation8 + $0x8] sm:$0xff]
    %v75 = vld [vmem:[#allocation2] sm:$0xff]
    %v76 = vmul.f32 %v71, %v73
    %v77 = vmul.f32 %v72, %v74
    %v78 = vadd.f32 %v76, %v77
    %v79 = vadd.f32 %v75, %v78
    %80 = vst [vmem:[#allocation2] sm:$0xff] %v79
    %v81 = vld [vmem:[#allocation3] sm:$0xff]
    %v82 = vmul.f32 %v71, %v71
    %v83 = vmul.f32 %v72, %v72
    %v84 = vadd.f32 %v82, %v83
    %v85 = vadd.f32 %v81, %v84
    %86 = vst [vmem:[#allocation3] sm:$0xff] %v85
    %v87 = vld [vmem:[#allocation4] sm:$0xff]
    %v88 = vmul.f32 %v73, %v73
    %v89 = vmul.f32 %v74, %v74
    %v90 = vadd.f32 %v88, %v89
    %v91 = vadd.f32 %v87, %v90
    %92 = vst [vmem:[#allocation4] sm:$0xff] %v91
    // Predicated region
    $region22: #{tpu_custom_call.1} parent=1 // pred_check
      %p93 = pneg %p64
    $region23: #{tpu_custom_call.1} parent=1 // pred_check_branch
      %95 = sbr.rel (%p93) target = $region25
    $region24: #{tpu_custom_call.1} parent=1 // pred_region
      %v96 = vld [vmem:[#allocation2] sm:$0xff]
      %97 = vadd.xlane.f32.xlu0 %v96
      %v98 = vpop.xlane.xlu0 %97
      %v99 = vrot.slane %v98, 4
      %v100 = vadd.f32 %v98, %v99
      %v101 = vrot.slane %v100, 2
      %v102 = vadd.f32 %v100, %v101
      %v103 = vrot.slane %v102, 1
      %v104 = vadd.f32 %v102, %v103
      %s105 = vtos %v104
      %s106 = scalar_lea.smem [#allocation10], 0
      %107 = sst [smem:[%s106]] %s105
      %v108 = vld [vmem:[#allocation3] sm:$0xff]
      %109 = vadd.xlane.f32.xlu0 %v108
      %v110 = vpop.xlane.xlu0 %109
      %v111 = vrot.slane %v110, 4
      %v112 = vadd.f32 %v110, %v111
      %v113 = vrot.slane %v112, 2
      %v114 = vadd.f32 %v112, %v113
      %v115 = vrot.slane %v114, 1
      %v116 = vadd.f32 %v114, %v115
      %s117 = vtos %v116
      %s118 = scalar_lea.smem [#allocation11], 0
      %119 = sst [smem:[%s118]] %s117
      %v120 = vld [vmem:[#allocation4] sm:$0xff]
      %121 = vadd.xlane.f32.xlu0 %v120
      %v122 = vpop.xlane.xlu0 %121
      %v123 = vrot.slane %v122, 4
      %v124 = vadd.f32 %v122, %v123
      %v125 = vrot.slane %v124, 2
      %v126 = vadd.f32 %v124, %v125
      %v127 = vrot.slane %v126, 1
      %v128 = vadd.f32 %v126, %v127
      %s129 = vtos %v128
      %s130 = scalar_lea.smem [#allocation13], 0
      %131 = sst [smem:[%s130]] %s129
    $region25: #{tpu_custom_call.1} parent=1 // pred_fallthru
      _
    // Predicated region
    $region26: #{tpu_custom_call.1} parent=1 // pred_check
      _
    $region27: #{tpu_custom_call.1} parent=1 // pred_check_branch
      %133 = sbr.rel (0) target = $region29
    $region28: #{tpu_custom_call.1} parent=1 // pred_region
      %s135 = ssub.s32 16, 16
      %136 = vsyncadd [#allocation7], %s135
      %139 = dma.smem_to_hbm [#allocation10], 16, %s2, [#allocation7]
    $region29: #{tpu_custom_call.1} parent=1 // pred_fallthru
      _
    // Predicated region
    $region30: #{tpu_custom_call.1} parent=1 // pred_check
      _
    $region31: #{tpu_custom_call.1} parent=1 // pred_check_branch
      %141 = sbr.rel (0) target = $region33
    $region32: #{tpu_custom_call.1} parent=1 // pred_region
      %s143 = ssub.s32 16, 16
      %144 = vsyncadd [#allocation12], %s143
      %147 = dma.smem_to_hbm [#allocation11], 16, %s3, [#allocation12]
    $region33: #{tpu_custom_call.1} parent=1 // pred_fallthru
      _
    // Predicated region
    $region34: #{tpu_custom_call.1} parent=1 // pred_check
      _
    $region35: #{tpu_custom_call.1} parent=1 // pred_check_branch
      %149 = sbr.rel (0) target = $region37
    $region36: #{tpu_custom_call.1} parent=1 // pred_region
      %s151 = ssub.s32 16, 16
      %152 = vsyncadd [#allocation12], %s151
      %155 = dma.smem_to_hbm [#allocation13], 16, %s4, [#allocation12]
    $region37: #{tpu_custom_call.1} parent=1 // pred_fallthru
      _
    // Predicated region
    $region38: #{tpu_custom_call.1} parent=1 // pred_check
      _
    $region39: #{tpu_custom_call.1} parent=1 // pred_check_branch
      %157 = sbr.rel (0) target = $region41
    $region40: #{tpu_custom_call.1} parent=1 // pred_region
      %158 = dma.done [#allocation7], 16
    $region41: #{tpu_custom_call.1} parent=1 // pred_fallthru
      _
    // Predicated region
    $region42: #{tpu_custom_call.1} parent=1 // pred_check
      _
    $region43: #{tpu_custom_call.1} parent=1 // pred_check_branch
      %160 = sbr.rel (0) target = $region45
    $region44: #{tpu_custom_call.1} parent=1 // pred_region
      %161 = dma.done [#allocation12], 16
    $region45: #{tpu_custom_call.1} parent=1 // pred_fallthru
      _
    // Predicated region
    $region46: #{tpu_custom_call.1} parent=1 // pred_check
      _
    $region47: #{tpu_custom_call.1} parent=1 // pred_check_branch
      %163 = sbr.rel (0) target = $region49
    $region48: #{tpu_custom_call.1} parent=1 // pred_region
      %164 = dma.done [#allocation12], 16
    $region49: #{tpu_custom_call.1} parent=1 // pred_fallthru
      _
    %165 = sfence
    %166 = vsyncpa [#allocation6], 1
    %167 = vsyncpa [#allocation9], 1
    %168 = vsyncpa [#allocation7], 1
    %169 = vsyncpa [#allocation12], 1

</llo_original>
